<compile_context>
chip_gen: v7x
topology: tpu7x:2x2x1
jax: 0.10.0
libtpu: 0.0.40
codegen_flags: <defaults>
</compile_context>

<pallas_src>
import functools

import jax
import jax.numpy as jnp
from jax.experimental import pallas as pl
from jax.experimental.pallas import tpu as pltpu


def _nearest_upsample_kernel(x_ref, o_ref, *, scale):
    # x_ref: (B, H, W)        -- a batch of (n, c) planes
    # o_ref: (B, H*s, W*s)    -- lane-dense, final-layout upsampled planes
    x = x_ref[...]
    b, h, w = x.shape
    # nearest-neighbour replication: out[b, h*s+ph, w*s+pw] = x[b, h, w]
    y = jnp.broadcast_to(x[:, :, None, :, None], (b, h, scale, w, scale))
    o_ref[...] = y.reshape(b, h * scale, w * scale)


def _choose_batch(nc, h, w, scale, itemsize):
    """Planes per grid step: biggest tile that double-buffers comfortably."""
    # per-plane VMEM footprint: input + s^2-sized output, each double-buffered
    per_plane = h * w * itemsize * (1 + scale * scale) * 2
    vmem_budget = 8 << 20  # conservative: fits v5e 16 MiB / v7x scoped VMEM
    b = max(1, min(nc, vmem_budget // max(per_plane, 1)))
    # keep the grid >= ~8 steps when possible so v7x megacore shards work
    if nc >= 8:
        b = min(b, max(1, nc // 8))
    return b


class TtInterpolate:
    def __init__(self, scale_factor, mode):
        # TODO(synk): only mode="nearest" with integer scale_factor is
        # implemented (the configuration HRNet uses); bilinear has no clean
        # single-kernel nearest-replication equivalent here.
        assert mode == "nearest", "only nearest mode implemented"
        self.scale_factor = int(scale_factor)
        assert self.scale_factor == scale_factor and self.scale_factor >= 1
        self.mode = mode

    def __call__(self, x):
        # x: NCHW
        N, C, H, W = x.shape
        s = self.scale_factor
        NC = N * C

        # leading-axis merge only -> free relabel (minor (H, W) layout kept)
        xf = x.reshape(NC, H, W)

        B = _choose_batch(NC, H, W, s, jnp.dtype(x.dtype).itemsize)
        grid = (pl.cdiv(NC, B),)

        out3 = pl.pallas_call(
            functools.partial(_nearest_upsample_kernel, scale=s),
            out_shape=jax.ShapeDtypeStruct((NC, H * s, W * s), x.dtype),
            grid=grid,
            in_specs=[pl.BlockSpec((B, H, W), lambda g: (g, 0, 0))],
            out_specs=pl.BlockSpec((B, H * s, W * s), lambda g: (g, 0, 0)),
            compiler_params=pltpu.CompilerParams(
                dimension_semantics=("parallel",)
            ),
        )(xf)

        # leading-axis split only -> free relabel to NCHW
        return out3.reshape(N, C, H * s, W * s)


if __name__ == "__main__":
    key = jax.random.PRNGKey(0)
    # small NCHW input consistent with the module's forward
    x = jax.random.normal(key, (2, 4, 16, 16), dtype=jnp.float32)

    mod = TtInterpolate(scale_factor=2, mode="nearest")
    out = jax.block_until_ready(mod(x))

    # reference: nearest upsample == element repeat along H and W
    ref = jnp.repeat(jnp.repeat(x, 2, axis=2), 2, axis=3)

    assert out.shape == (2, 4, 32, 32), out.shape
    assert out.dtype == x.dtype
    assert jnp.allclose(out, ref), "mismatch vs nearest-interpolate reference"

    print("KERNEL_OK")
</pallas_src>

<mosaic_0001>
module attributes {stable_mosaic.version = 11 : i64} {
  func.func @_nearest_upsample_kernel(%arg0: i32, %arg1: memref<1x16x16xf32, #tpu.memory_space<vmem>>, %arg2: memref<1x32x32xf32, #tpu.memory_space<vmem>>) attributes {dimension_semantics = [#tpu.dimension_semantics<parallel>], iteration_bounds = array<i64: 8>, scalar_prefetch = 0 : i64, scratch_operands = 0 : i64, tpu.core_type = #tpu.core_type<tc>, window_params = [{transform_indices = @transform_0, window_bounds = array<i64: 1, 16, 16>}, {transform_indices = @transform_1, window_bounds = array<i64: 1, 32, 32>}]} {
    %c0 = arith.constant 0 : index
    %c0_0 = arith.constant 0 : index
    %c0_1 = arith.constant 0 : index
    %0 = vector.load %arg1[%c0, %c0_0, %c0_1] : memref<1x16x16xf32, #tpu.memory_space<vmem>>, vector<1x16x16xf32>
    %1 = vector.shape_cast %0 : vector<1x16x16xf32> to vector<1x16x1x16x1xf32>
    %2 = vector.shape_cast %1 : vector<1x16x1x16x1xf32> to vector<1x16x1x16x1xf32>
    %3 = vector.broadcast %2 : vector<1x16x1x16x1xf32> to vector<1x16x2x16x2xf32>
    %4 = vector.shape_cast %3 : vector<1x16x2x16x2xf32> to vector<1x32x32xf32>
    %c0_2 = arith.constant 0 : index
    %c0_3 = arith.constant 0 : index
    %c0_4 = arith.constant 0 : index
    %5 = vector.load %arg2[%c0_2, %c0_3, %c0_4] : memref<1x32x32xf32, #tpu.memory_space<vmem>>, vector<1x32x32xf32>
    tpu.vector_store %arg2[%c0_2, %c0_3, %c0_4], %4 {strides = array<i32>} : memref<1x32x32xf32, #tpu.memory_space<vmem>>, vector<1x32x32xf32>,
    return
  }
  func.func @transform_0(%arg0: i32) -> (i32, i32, i32) {
    %c0_i32 = arith.constant 0 : i32
    %c0_i32_0 = arith.constant 0 : i32
    %c0_i32_1 = arith.constant 0 : i32
    return %arg0, %c0_i32, %c0_i32_0 : i32, i32, i32
  }
  func.func @transform_1(%arg0: i32) -> (i32, i32, i32) {
    %c0_i32 = arith.constant 0 : i32
    %c0_i32_0 = arith.constant 0 : i32
    %c0_i32_1 = arith.constant 0 : i32
    return %arg0, %c0_i32, %c0_i32_0 : i32, i32, i32
  }
}

</mosaic_0001>

<llo_original>
// kernel: tpu_custom_call.1
$region0: #{tpu_custom_call.1}
  #allocation0 [shape = 'u32[]', space=smem, size = 0x4, offset = 0x4, fixed_abs, tag = 'smem constant byte address 0x4 - core index']
  #allocation1 [shape = 'u32[144,128]{1,0:T(1,128)}', space=vmem, size = 0x12000, scoped, tag = 'internal scratch']
  %s0 = inlined_call_operand.hbm [shape: f32[8,16,16], index: 0, kind: input, shape index: {}]
  %s1 = inlined_call_operand.hbm [shape: f32[8,32,32], index: 1, kind: output, shape index: {}]
  %s2 = sld [smem:[#allocation0]]
  $region41: #{tpu_custom_call.1} parent=0
    _
  %s4 = ssub.s32 1, %s2
  %s5 = scalar_select 0, %s4, %s2
  $region1: #{tpu_custom_call.1} parent=0
    #allocation2 [shape = 'u8[16384]{0}', space=vmem, size = 0x4000, scoped, tag = 'input window, operand 0']
    #allocation3 [shape = 's32[2]{0}', space=sflag, size = 0x8, scoped, tag = 'scoped memory for tpu_custom_call.1']
    #allocation4 [shape = 's32[2]{0}', space=sflag, size = 0x8, scoped, tag = 'scoped memory for tpu_custom_call.1']
    #allocation5 [shape = 'u8[32768]{0}', space=vmem, size = 0x8000, scoped, tag = 'output window, operand 0']
    %6 = vsyncpa [#allocation3], 0
    %s7 = scalar_lea.sflag [#allocation3], 1
    %8 = vsyncpa %s7, 0
    %9 = vsyncpa [#allocation4], 0
    %s10 = scalar_lea.sflag [#allocation4], 1
    %11 = vsyncpa %s10, 0
    loop: start=0, step=1, limit=10
    $region2: #{tpu_custom_call.1} parent=1 // loop_pre_header
      _
    $region3: #{tpu_custom_call.1} parent=1 // loop_header
      %s13 = sphi 0, %s17
      %p14 = scmp.ge.s32.totalorder %s13, 10
      %s23 = sphi 0, %s25
      %s26 = sphi 0, %s23
      %s27 = sphi 0, %s26
      %s43 = sphi 0, %s27
      %s49 = sphi 0, %s51
      %s52 = sphi 0, %s49
      %s53 = sphi 0, %s52
      %s69 = sphi 0, %s53
    $region4: #{tpu_custom_call.1} parent=1 // loop_header_branch
      %16 = sbr.rel (%p14) target = $region8
    $region5: #{tpu_custom_call.1} parent=1 // loop_body
      %s18 = ssub.s32 %s13, 1
      %s19 = ssub.s32 %s13, 2
      %s20 = sadd.s32 %s13, 1
      %s21 = ssub.s32 %s13, %s20
      %p22 = scmp.eq.s32.totalorder %s21, 0
      %s24 = sadd.s32 %s23, 1
      %s25 = scalar_select %p22, %s23, %s24
      %p28 = pneg %p22
      %p29 = scmp.eq.s32.totalorder %s13, 7
      %p30 = por %p28, %p29
      %p31 = scmp.ne.s32.totalorder %s23, %s26
      %p32 = scmp.eq.s32.totalorder %s13, 0
      %p33 = por %p31, %p32
      %p34 = scmp.ne.s32.totalorder %s23, %s26
      %p35 = scmp.eq.s32.totalorder %s18, 7
      %p36 = por %p34, %p35
      %p37 = scmp.ne.s32.totalorder %s26, %s27
      %p38 = scmp.eq.s32.totalorder %s18, 0
      %p39 = por %p37, %p38
      %p40 = scmp.ne.s32.totalorder %s26, %s27
      %p41 = scmp.eq.s32.totalorder %s19, 7
      %p42 = por %p40, %p41
      %p44 = scmp.ne.s32.totalorder %s27, %s43
      %p45 = scmp.eq.s32.totalorder %s19, 0
      %p46 = por %p44, %p45
      %s47 = ssub.s32 %s13, %s20
      %p48 = scmp.eq.s32.totalorder %s47, 0
      %s50 = sadd.s32 %s49, 1
      %s51 = scalar_select %p48, %s49, %s50
      %p54 = pneg %p48
      %p55 = scmp.eq.s32.totalorder %s13, 7
      %p56 = por %p54, %p55
      %p57 = scmp.ne.s32.totalorder %s49, %s52
      %p58 = scmp.eq.s32.totalorder %s13, 0
      %p59 = por %p57, %p58
      %p60 = scmp.ne.s32.totalorder %s49, %s52
      %p61 = scmp.eq.s32.totalorder %s18, 7
      %p62 = por %p60, %p61
      %p63 = scmp.ne.s32.totalorder %s52, %s53
      %p64 = scmp.eq.s32.totalorder %s18, 0
      %p65 = por %p63, %p64
      %p66 = scmp.ne.s32.totalorder %s52, %s53
      %p67 = scmp.eq.s32.totalorder %s19, 7
      %p68 = por %p66, %p67
      %p70 = scmp.ne.s32.totalorder %s53, %s69
      %p71 = scmp.eq.s32.totalorder %s19, 0
      %p72 = por %p70, %p71
      %p73 = scmp.le.s32.totalorder 1, %s13
      %p74 = scmp.lt.s32.totalorder %s13, 9
      %p75 = pnand %p73, %p74
      %p76 = pneg %p75
      // Predicated region
      $region9: #{tpu_custom_call.1} parent=5 // pred_check
        _
      $region10: #{tpu_custom_call.1} parent=5 // pred_check_branch
        %78 = sbr.rel (%p75) target = $region12
      $region11: #{tpu_custom_call.1} parent=5 // pred_region
        %s79 = ssub.s32 %s13, 1
      $region12: #{tpu_custom_call.1} parent=5 // pred_fallthru
        _
      %p80 = scmp.lt.s32.totalorder %s13, 8
      // Predicated region
      $region13: #{tpu_custom_call.1} parent=5 // pred_check
        %p81 = pneg %p80
      $region14: #{tpu_custom_call.1} parent=5 // pred_check_branch
        %83 = sbr.rel (%p81) target = $region16
      $region15: #{tpu_custom_call.1} parent=5 // pred_region
        // Predicated region
        $region17: #{tpu_custom_call.1} parent=15 // pred_check
          %p84 = pneg %p33
        $region18: #{tpu_custom_call.1} parent=15 // pred_check_branch
          %86 = sbr.rel (%p84) target = $region20
        $region19: #{tpu_custom_call.1} parent=15 // pred_region
          %s87 = sand.u32 %s23, 1
          %s88 = scalar_lea.sflag [#allocation3], %s87
          %s89 = sand.u32 %s23, 1
          %s90 = smul.addr %s89, 16
          %s91 = scalar_lea.vmem [#allocation2], %s90
          %s93 = ssub.s32 256, 256
          %94 = vsyncadd %s88, %s93
          %s95 = smul.addr %s13, 2
          %s96 = smul.addr %s95, 128
          %s97 = scalar_lea.hbm %s0, %s96
          %s98 = sshll.u32 %s91, 4
          %s99 = int_to_ptr.vmem [resolvable:$true] %s98
          %104 = dma.hbm_to_vmem [thread:$0]  %s97, 256, %s99, %s88, 128, 128, 8
        $region20: #{tpu_custom_call.1} parent=15 // pred_fallthru
          _
      $region16: #{tpu_custom_call.1} parent=5 // pred_fallthru
        _
      %p105 = scmp.le.s32.totalorder 1, %s13
      %p106 = scmp.lt.s32.totalorder %s13, 9
      %p107 = pnand %p105, %p106
      %p108 = pneg %p107
      // Predicated region
      $region21: #{tpu_custom_call.1} parent=5 // pred_check
        _
      $region22: #{tpu_custom_call.1} parent=5 // pred_check_branch
        %110 = sbr.rel (%p107) target = $region24
      $region23: #{tpu_custom_call.1} parent=5 // pred_region
        %s111 = ssub.s32 %s13, 1
        %s112 = sand.u32 %s26, 1
        %s113 = scalar_lea.sflag [#allocation3], %s112
        %s114 = sand.u32 %s26, 1
        %s115 = smul.addr %s114, 16
        %s116 = scalar_lea.vmem [#allocation2], %s115
        // Predicated region
        $region25: #{tpu_custom_call.1} parent=23 // pred_check
          %p117 = pneg %p39
        $region26: #{tpu_custom_call.1} parent=23 // pred_check_branch
          %119 = sbr.rel (%p117) target = $region28
        $region27: #{tpu_custom_call.1} parent=23 // pred_region
          %120 = dma.done %s113, 256
        $region28: #{tpu_custom_call.1} parent=23 // pred_fallthru
          _
        %s121 = sand.u32 %s26, 1
        %s122 = scalar_lea.sflag [#allocation3], %s121
        %s123 = sand.u32 %s26, 1
        %s124 = smul.addr %s123, 16
        %s125 = scalar_lea.vmem [#allocation2], %s124
        %p126 = pneg %p39
        %p127 = pneg %p36
        %p128 = pneg %p65
        %p129 = pneg %p62
        %s130 = sand.u32 %s52, 1
        %s131 = scalar_lea.sflag [#allocation4], %s130
        %s132 = sand.u32 %s52, 1
        %s133 = smul.addr %s132, 32
        %s134 = scalar_lea.vmem [#allocation5], %s133
        %v135 = vld [vmem:[%s116] sm:$0xff]
        %v136 = vld [vmem:[%s116 + $0x8] sm:$0xff]
        %v137 = vlaneseq
        %v138 = vshrl.u32 %v137, 7
        %v139 = vsub.s32 0, %v138
        %v140 = vrot.slane %v135, %v139
        %142 = vbcast.lane.b32.xlu0 %v140, 256
        %v143 = vpop.permute.xlu0 %142
        %s145 = sor.u32 256, 8
        %146 = vbcast.lane.b32.xlu0 %v140, %s145
        %v147 = vpop.permute.xlu0 %146
        %v148 = vlaneseq
        %v149 = vshrl.u32 %v148, 7
        %v150 = vsub.s32 1, %v149
        %v151 = vrot.slane %v135, %v150
        %153 = vbcast.lane.b32.xlu0 %v151, 256
        %v154 = vpop.permute.xlu0 %153
        %s156 = sor.u32 256, 8
        %157 = vbcast.lane.b32.xlu0 %v151, %s156
        %v158 = vpop.permute.xlu0 %157
        %v159 = vlaneseq
        %v160 = vshrl.u32 %v159, 7
        %v161 = vsub.s32 2, %v160
        %v162 = vrot.slane %v135, %v161
        %164 = vbcast.lane.b32.xlu0 %v162, 256
        %v165 = vpop.permute.xlu0 %164
        %s167 = sor.u32 256, 8
        %168 = vbcast.lane.b32.xlu0 %v162, %s167
        %v169 = vpop.permute.xlu0 %168
        %v170 = vlaneseq
        %v171 = vshrl.u32 %v170, 7
        %v172 = vsub.s32 3, %v171
        %v173 = vrot.slane %v135, %v172
        %175 = vbcast.lane.b32.xlu0 %v173, 256
        %v176 = vpop.permute.xlu0 %175
        %s178 = sor.u32 256, 8
        %179 = vbcast.lane.b32.xlu0 %v173, %s178
        %v180 = vpop.permute.xlu0 %179
        %v181 = vlaneseq
        %v182 = vshrl.u32 %v181, 7
        %v183 = vsub.s32 4, %v182
        %v184 = vrot.slane %v135, %v183
        %186 = vbcast.lane.b32.xlu0 %v184, 256
        %v187 = vpop.permute.xlu0 %186
        %s189 = sor.u32 256, 8
        %190 = vbcast.lane.b32.xlu0 %v184, %s189
        %v191 = vpop.permute.xlu0 %190
        %v192 = vlaneseq
        %v193 = vshrl.u32 %v192, 7
        %v194 = vsub.s32 5, %v193
        %v195 = vrot.slane %v135, %v194
        %197 = vbcast.lane.b32.xlu0 %v195, 256
        %v198 = vpop.permute.xlu0 %197
        %s200 = sor.u32 256, 8
        %201 = vbcast.lane.b32.xlu0 %v195, %s200
        %v202 = vpop.permute.xlu0 %201
        %v203 = vlaneseq
        %v204 = vshrl.u32 %v203, 7
        %v205 = vsub.s32 6, %v204
        %v206 = vrot.slane %v135, %v205
        %208 = vbcast.lane.b32.xlu0 %v206, 256
        %v209 = vpop.permute.xlu0 %208
        %s211 = sor.u32 256, 8
        %212 = vbcast.lane.b32.xlu0 %v206, %s211
        %v213 = vpop.permute.xlu0 %212
        %v214 = vlaneseq
        %v215 = vshrl.u32 %v214, 7
        %v216 = vsub.s32 7, %v215
        %v217 = vrot.slane %v135, %v216
        %219 = vbcast.lane.b32.xlu0 %v217, 256
        %v220 = vpop.permute.xlu0 %219
        %s222 = sor.u32 256, 8
        %223 = vbcast.lane.b32.xlu0 %v217, %s222
        %v224 = vpop.permute.xlu0 %223
        %v225 = vlaneseq
        %v226 = vshrl.u32 %v225, 7
        %v227 = vsub.s32 0, %v226
        %v228 = vrot.slane %v136, %v227
        %230 = vbcast.lane.b32.xlu0 %v228, 256
        %v231 = vpop.permute.xlu0 %230
        %s233 = sor.u32 256, 8
        %234 = vbcast.lane.b32.xlu0 %v228, %s233
        %v235 = vpop.permute.xlu0 %234
        %v236 = vlaneseq
        %v237 = vshrl.u32 %v236, 7
        %v238 = vsub.s32 1, %v237
        %v239 = vrot.slane %v136, %v238
        %241 = vbcast.lane.b32.xlu0 %v239, 256
        %v242 = vpop.permute.xlu0 %241
        %s244 = sor.u32 256, 8
        %245 = vbcast.lane.b32.xlu0 %v239, %s244
        %v246 = vpop.permute.xlu0 %245
        %v247 = vlaneseq
        %v248 = vshrl.u32 %v247, 7
        %v249 = vsub.s32 2, %v248
        %v250 = vrot.slane %v136, %v249
        %252 = vbcast.lane.b32.xlu0 %v250, 256
        %v253 = vpop.permute.xlu0 %252
        %s255 = sor.u32 256, 8
        %256 = vbcast.lane.b32.xlu0 %v250, %s255
        %v257 = vpop.permute.xlu0 %256
        %v258 = vlaneseq
        %v259 = vshrl.u32 %v258, 7
        %v260 = vsub.s32 3, %v259
        %v261 = vrot.slane %v136, %v260
        %263 = vbcast.lane.b32.xlu0 %v261, 256
        %v264 = vpop.permute.xlu0 %263
        %s266 = sor.u32 256, 8
        %267 = vbcast.lane.b32.xlu0 %v261, %s266
        %v268 = vpop.permute.xlu0 %267
        %v269 = vlaneseq
        %v270 = vshrl.u32 %v269, 7
        %v271 = vsub.s32 4, %v270
        %v272 = vrot.slane %v136, %v271
        %274 = vbcast.lane.b32.xlu0 %v272, 256
        %v275 = vpop.permute.xlu0 %274
        %s277 = sor.u32 256, 8
        %278 = vbcast.lane.b32.xlu0 %v272, %s277
        %v279 = vpop.permute.xlu0 %278
        %v280 = vlaneseq
        %v281 = vshrl.u32 %v280, 7
        %v282 = vsub.s32 5, %v281
        %v283 = vrot.slane %v136, %v282
        %285 = vbcast.lane.b32.xlu0 %v283, 256
        %v286 = vpop.permute.xlu0 %285
        %s288 = sor.u32 256, 8
        %289 = vbcast.lane.b32.xlu0 %v283, %s288
        %v290 = vpop.permute.xlu0 %289
        %v291 = vlaneseq
        %v292 = vshrl.u32 %v291, 7
        %v293 = vsub.s32 6, %v292
        %v294 = vrot.slane %v136, %v293
        %296 = vbcast.lane.b32.xlu0 %v294, 256
        %v297 = vpop.permute.xlu0 %296
        %s299 = sor.u32 256, 8
        %300 = vbcast.lane.b32.xlu0 %v294, %s299
        %v301 = vpop.permute.xlu0 %300
        %v302 = vlaneseq
        %v303 = vshrl.u32 %v302, 7
        %v304 = vsub.s32 7, %v303
        %v305 = vrot.slane %v136, %v304
        %307 = vbcast.lane.b32.xlu0 %v305, 256
        %v308 = vpop.permute.xlu0 %307
        %s310 = sor.u32 256, 8
        %311 = vbcast.lane.b32.xlu0 %v305, %s310
        %v312 = vpop.permute.xlu0 %311
        %v313 = vcombine.low %v143, %v154
        %v314 = vcombine.high %v143, %v154
        %v316 = vunpack.c.l.s4 1983009808
        %v317 = vunpack.c.0.s8 %v316
        %v318 = vlaneseq
        %v319 = vshrl.u32 %v318, 7
        %v320 = vsub.s32 %v317, %v319
        %v321 = vrot.slane %v313, %v320
        %v323 = vunpack.c.l.s4 1983009808
        %v324 = vunpack.c.0.s8 %v323
        %v325 = vlaneseq
        %v326 = vshrl.u32 %v325, 7
        %v327 = vsub.s32 %v324, %v326
        %v328 = vrot.slane %v314, %v327
        %v329 = vcombine.low %v165, %v176
        %v330 = vcombine.high %v165, %v176
        %v332 = vunpack.c.l.s4 1983009808
        %v333 = vunpack.c.0.s8 %v332
        %v334 = vlaneseq
        %v335 = vshrl.u32 %v334, 7
        %v336 = vsub.s32 %v333, %v335
        %v337 = vrot.slane %v329, %v336
        %v339 = vunpack.c.l.s4 1983009808
        %v340 = vunpack.c.0.s8 %v339
        %v341 = vlaneseq
        %v342 = vshrl.u32 %v341, 7
        %v343 = vsub.s32 %v340, %v342
        %v344 = vrot.slane %v330, %v343
        %v345 = vcombine.low %v321, %v321
        %v346 = vcombine.high %v321, %v321
        %v348 = vunpack.c.l.s4 1934713408
        %v349 = vunpack.c.0.s8 %v348
        %v350 = vlaneseq
        %v351 = vshrl.u32 %v350, 7
        %v352 = vsub.s32 %v349, %v351
        %v353 = vrot.slane %v345, %v352
        %v355 = vunpack.c.l.s4 1934713408
        %v356 = vunpack.c.0.s8 %v355
        %v357 = vlaneseq
        %v358 = vshrl.u32 %v357, 7
        %v359 = vsub.s32 %v356, %v358
        %v360 = vrot.slane %v346, %v359
        %v361 = vcombine.low %v328, %v328
        %v362 = vcombine.high %v328, %v328
        %v364 = vunpack.c.l.s4 1934713408
        %v365 = vunpack.c.0.s8 %v364
        %v366 = vlaneseq
        %v367 = vshrl.u32 %v366, 7
        %v368 = vsub.s32 %v365, %v367
        %v369 = vrot.slane %v361, %v368
        %v371 = vunpack.c.l.s4 1934713408
        %v372 = vunpack.c.0.s8 %v371
        %v373 = vlaneseq
        %v374 = vshrl.u32 %v373, 7
        %v375 = vsub.s32 %v372, %v374
        %v376 = vrot.slane %v362, %v375
        %v377 = vcombine.low %v337, %v337
        %v378 = vcombine.high %v337, %v337
        %v380 = vunpack.c.l.s4 1934713408
        %v381 = vunpack.c.0.s8 %v380
        %v382 = vlaneseq
        %v383 = vshrl.u32 %v382, 7
        %v384 = vsub.s32 %v381, %v383
        %v385 = vrot.slane %v377, %v384
        %v387 = vunpack.c.l.s4 1934713408
        %v388 = vunpack.c.0.s8 %v387
        %v389 = vlaneseq
        %v390 = vshrl.u32 %v389, 7
        %v391 = vsub.s32 %v388, %v390
        %v392 = vrot.slane %v378, %v391
        %v393 = vcombine.low %v344, %v344
        %v394 = vcombine.high %v344, %v344
        %v396 = vunpack.c.l.s4 1934713408
        %v397 = vunpack.c.0.s8 %v396
        %v398 = vlaneseq
        %v399 = vshrl.u32 %v398, 7
        %v400 = vsub.s32 %v397, %v399
        %v401 = vrot.slane %v393, %v400
        %v403 = vunpack.c.l.s4 1934713408
        %v404 = vunpack.c.0.s8 %v403
        %v405 = vlaneseq
        %v406 = vshrl.u32 %v405, 7
        %v407 = vsub.s32 %v404, %v406
        %v408 = vrot.slane %v394, %v407
        %v409 = vcombine.low %v353, %v385
        %v410 = vcombine.high %v353, %v385
        %v411 = vcombine.low %v360, %v392
        %v412 = vcombine.high %v360, %v392
        %v413 = vcombine.low %v369, %v401
        %v414 = vcombine.high %v369, %v401
        %v415 = vcombine.low %v376, %v408
        %v416 = vcombine.high %v376, %v408
        %v417 = vcombine.low %v187, %v198
        %v418 = vcombine.high %v187, %v198
        %v420 = vunpack.c.l.s4 1983009808
        %v421 = vunpack.c.0.s8 %v420
        %v422 = vlaneseq
        %v423 = vshrl.u32 %v422, 7
        %v424 = vsub.s32 %v421, %v423
        %v425 = vrot.slane %v417, %v424
        %v427 = vunpack.c.l.s4 1983009808
        %v428 = vunpack.c.0.s8 %v427
        %v429 = vlaneseq
        %v430 = vshrl.u32 %v429, 7
        %v431 = vsub.s32 %v428, %v430
        %v432 = vrot.slane %v418, %v431
        %v433 = vcombine.low %v209, %v220
        %v434 = vcombine.high %v209, %v220
        %v436 = vunpack.c.l.s4 1983009808
        %v437 = vunpack.c.0.s8 %v436
        %v438 = vlaneseq
        %v439 = vshrl.u32 %v438, 7
        %v440 = vsub.s32 %v437, %v439
        %v441 = vrot.slane %v433, %v440
        %v443 = vunpack.c.l.s4 1983009808
        %v444 = vunpack.c.0.s8 %v443
        %v445 = vlaneseq
        %v446 = vshrl.u32 %v445, 7
        %v447 = vsub.s32 %v444, %v446
        %v448 = vrot.slane %v434, %v447
        %v449 = vcombine.low %v425, %v425
        %v450 = vcombine.high %v425, %v425
        %v452 = vunpack.c.l.s4 1934713408
        %v453 = vunpack.c.0.s8 %v452
        %v454 = vlaneseq
        %v455 = vshrl.u32 %v454, 7
        %v456 = vsub.s32 %v453, %v455
        %v457 = vrot.slane %v449, %v456
        %v459 = vunpack.c.l.s4 1934713408
        %v460 = vunpack.c.0.s8 %v459
        %v461 = vlaneseq
        %v462 = vshrl.u32 %v461, 7
        %v463 = vsub.s32 %v460, %v462
        %v464 = vrot.slane %v450, %v463
        %v465 = vcombine.low %v432, %v432
        %v466 = vcombine.high %v432, %v432
        %v468 = vunpack.c.l.s4 1934713408
        %v469 = vunpack.c.0.s8 %v468
        %v470 = vlaneseq
        %v471 = vshrl.u32 %v470, 7
        %v472 = vsub.s32 %v469, %v471
        %v473 = vrot.slane %v465, %v472
        %v475 = vunpack.c.l.s4 1934713408
        %v476 = vunpack.c.0.s8 %v475
        %v477 = vlaneseq
        %v478 = vshrl.u32 %v477, 7
        %v479 = vsub.s32 %v476, %v478
        %v480 = vrot.slane %v466, %v479
        %v481 = vcombine.low %v441, %v441
        %v482 = vcombine.high %v441, %v441
        %v484 = vunpack.c.l.s4 1934713408
        %v485 = vunpack.c.0.s8 %v484
        %v486 = vlaneseq
        %v487 = vshrl.u32 %v486, 7
        %v488 = vsub.s32 %v485, %v487
        %v489 = vrot.slane %v481, %v488
        %v491 = vunpack.c.l.s4 1934713408
        %v492 = vunpack.c.0.s8 %v491
        %v493 = vlaneseq
        %v494 = vshrl.u32 %v493, 7
        %v495 = vsub.s32 %v492, %v494
        %v496 = vrot.slane %v482, %v495
        %v497 = vcombine.low %v448, %v448
        %v498 = vcombine.high %v448, %v448
        %v500 = vunpack.c.l.s4 1934713408
        %v501 = vunpack.c.0.s8 %v500
        %v502 = vlaneseq
        %v503 = vshrl.u32 %v502, 7
        %v504 = vsub.s32 %v501, %v503
        %v505 = vrot.slane %v497, %v504
        %v507 = vunpack.c.l.s4 1934713408
        %v508 = vunpack.c.0.s8 %v507
        %v509 = vlaneseq
        %v510 = vshrl.u32 %v509, 7
        %v511 = vsub.s32 %v508, %v510
        %v512 = vrot.slane %v498, %v511
        %v513 = vcombine.low %v457, %v489
        %v514 = vcombine.high %v457, %v489
        %v515 = vcombine.low %v464, %v496
        %v516 = vcombine.high %v464, %v496
        %v517 = vcombine.low %v473, %v505
        %v518 = vcombine.high %v473, %v505
        %v519 = vcombine.low %v480, %v512
        %v520 = vcombine.high %v480, %v512
        %v521 = vcombine.low %v231, %v242
        %v522 = vcombine.high %v231, %v242
        %v524 = vunpack.c.l.s4 1983009808
        %v525 = vunpack.c.0.s8 %v524
        %v526 = vlaneseq
        %v527 = vshrl.u32 %v526, 7
        %v528 = vsub.s32 %v525, %v527
        %v529 = vrot.slane %v521, %v528
        %v531 = vunpack.c.l.s4 1983009808
        %v532 = vunpack.c.0.s8 %v531
        %v533 = vlaneseq
        %v534 = vshrl.u32 %v533, 7
        %v535 = vsub.s32 %v532, %v534
        %v536 = vrot.slane %v522, %v535
        %v537 = vcombine.low %v253, %v264
        %v538 = vcombine.high %v253, %v264
        %v540 = vunpack.c.l.s4 1983009808
        %v541 = vunpack.c.0.s8 %v540
        %v542 = vlaneseq
        %v543 = vshrl.u32 %v542, 7
        %v544 = vsub.s32 %v541, %v543
        %v545 = vrot.slane %v537, %v544
        %v547 = vunpack.c.l.s4 1983009808
        %v548 = vunpack.c.0.s8 %v547
        %v549 = vlaneseq
        %v550 = vshrl.u32 %v549, 7
        %v551 = vsub.s32 %v548, %v550
        %v552 = vrot.slane %v538, %v551
        %v553 = vcombine.low %v529, %v529
        %v554 = vcombine.high %v529, %v529
        %v556 = vunpack.c.l.s4 1934713408
        %v557 = vunpack.c.0.s8 %v556
        %v558 = vlaneseq
        %v559 = vshrl.u32 %v558, 7
        %v560 = vsub.s32 %v557, %v559
        %v561 = vrot.slane %v553, %v560
        %v563 = vunpack.c.l.s4 1934713408
        %v564 = vunpack.c.0.s8 %v563
        %v565 = vlaneseq
        %v566 = vshrl.u32 %v565, 7
        %v567 = vsub.s32 %v564, %v566
        %v568 = vrot.slane %v554, %v567
        %v569 = vcombine.low %v536, %v536
        %v570 = vcombine.high %v536, %v536
        %v572 = vunpack.c.l.s4 1934713408
        %v573 = vunpack.c.0.s8 %v572
        %v574 = vlaneseq
        %v575 = vshrl.u32 %v574, 7
        %v576 = vsub.s32 %v573, %v575
        %v577 = vrot.slane %v569, %v576
        %v579 = vunpack.c.l.s4 1934713408
        %v580 = vunpack.c.0.s8 %v579
        %v581 = vlaneseq
        %v582 = vshrl.u32 %v581, 7
        %v583 = vsub.s32 %v580, %v582
        %v584 = vrot.slane %v570, %v583
        %v585 = vcombine.low %v545, %v545
        %v586 = vcombine.high %v545, %v545
        %v588 = vunpack.c.l.s4 1934713408
        %v589 = vunpack.c.0.s8 %v588
        %v590 = vlaneseq
        %v591 = vshrl.u32 %v590, 7
        %v592 = vsub.s32 %v589, %v591
        %v593 = vrot.slane %v585, %v592
        %v595 = vunpack.c.l.s4 1934713408
        %v596 = vunpack.c.0.s8 %v595
        %v597 = vlaneseq
        %v598 = vshrl.u32 %v597, 7
        %v599 = vsub.s32 %v596, %v598
        %v600 = vrot.slane %v586, %v599
        %v601 = vcombine.low %v552, %v552
        %v602 = vcombine.high %v552, %v552
        %v604 = vunpack.c.l.s4 1934713408
        %v605 = vunpack.c.0.s8 %v604
        %v606 = vlaneseq
        %v607 = vshrl.u32 %v606, 7
        %v608 = vsub.s32 %v605, %v607
        %v609 = vrot.slane %v601, %v608
        %v611 = vunpack.c.l.s4 1934713408
        %v612 = vunpack.c.0.s8 %v611
        %v613 = vlaneseq
        %v614 = vshrl.u32 %v613, 7
        %v615 = vsub.s32 %v612, %v614
        %v616 = vrot.slane %v602, %v615
        %v617 = vcombine.low %v561, %v593
        %v618 = vcombine.high %v561, %v593
        %v619 = vcombine.low %v568, %v600
        %v620 = vcombine.high %v568, %v600
        %v621 = vcombine.low %v577, %v609
        %v622 = vcombine.high %v577, %v609
        %v623 = vcombine.low %v584, %v616
        %v624 = vcombine.high %v584, %v616
        %v625 = vcombine.low %v275, %v286
        %v626 = vcombine.high %v275, %v286
        %v628 = vunpack.c.l.s4 1983009808
        %v629 = vunpack.c.0.s8 %v628
        %v630 = vlaneseq
        %v631 = vshrl.u32 %v630, 7
        %v632 = vsub.s32 %v629, %v631
        %v633 = vrot.slane %v625, %v632
        %v635 = vunpack.c.l.s4 1983009808
        %v636 = vunpack.c.0.s8 %v635
        %v637 = vlaneseq
        %v638 = vshrl.u32 %v637, 7
        %v639 = vsub.s32 %v636, %v638
        %v640 = vrot.slane %v626, %v639
        %v641 = vcombine.low %v297, %v308
        %v642 = vcombine.high %v297, %v308
        %v644 = vunpack.c.l.s4 1983009808
        %v645 = vunpack.c.0.s8 %v644
        %v646 = vlaneseq
        %v647 = vshrl.u32 %v646, 7
        %v648 = vsub.s32 %v645, %v647
        %v649 = vrot.slane %v641, %v648
        %v651 = vunpack.c.l.s4 1983009808
        %v652 = vunpack.c.0.s8 %v651
        %v653 = vlaneseq
        %v654 = vshrl.u32 %v653, 7
        %v655 = vsub.s32 %v652, %v654
        %v656 = vrot.slane %v642, %v655
        %v657 = vcombine.low %v633, %v633
        %v658 = vcombine.high %v633, %v633
        %v660 = vunpack.c.l.s4 1934713408
        %v661 = vunpack.c.0.s8 %v660
        %v662 = vlaneseq
        %v663 = vshrl.u32 %v662, 7
        %v664 = vsub.s32 %v661, %v663
        %v665 = vrot.slane %v657, %v664
        %v667 = vunpack.c.l.s4 1934713408
        %v668 = vunpack.c.0.s8 %v667
        %v669 = vlaneseq
        %v670 = vshrl.u32 %v669, 7
        %v671 = vsub.s32 %v668, %v670
        %v672 = vrot.slane %v658, %v671
        %v673 = vcombine.low %v640, %v640
        %v674 = vcombine.high %v640, %v640
        %v676 = vunpack.c.l.s4 1934713408
        %v677 = vunpack.c.0.s8 %v676
        %v678 = vlaneseq
        %v679 = vshrl.u32 %v678, 7
        %v680 = vsub.s32 %v677, %v679
        %v681 = vrot.slane %v673, %v680
        %v683 = vunpack.c.l.s4 1934713408
        %v684 = vunpack.c.0.s8 %v683
        %v685 = vlaneseq
        %v686 = vshrl.u32 %v685, 7
        %v687 = vsub.s32 %v684, %v686
        %v688 = vrot.slane %v674, %v687
        %v689 = vcombine.low %v649, %v649
        %v690 = vcombine.high %v649, %v649
        %v692 = vunpack.c.l.s4 1934713408
        %v693 = vunpack.c.0.s8 %v692
        %v694 = vlaneseq
        %v695 = vshrl.u32 %v694, 7
        %v696 = vsub.s32 %v693, %v695
        %v697 = vrot.slane %v689, %v696
        %v699 = vunpack.c.l.s4 1934713408
        %v700 = vunpack.c.0.s8 %v699
        %v701 = vlaneseq
        %v702 = vshrl.u32 %v701, 7
        %v703 = vsub.s32 %v700, %v702
        %v704 = vrot.slane %v690, %v703
        %v705 = vcombine.low %v656, %v656
        %v706 = vcombine.high %v656, %v656
        %v708 = vunpack.c.l.s4 1934713408
        %v709 = vunpack.c.0.s8 %v708
        %v710 = vlaneseq
        %v711 = vshrl.u32 %v710, 7
        %v712 = vsub.s32 %v709, %v711
        %v713 = vrot.slane %v705, %v712
        %v715 = vunpack.c.l.s4 1934713408
        %v716 = vunpack.c.0.s8 %v715
        %v717 = vlaneseq
        %v718 = vshrl.u32 %v717, 7
        %v719 = vsub.s32 %v716, %v718
        %v720 = vrot.slane %v706, %v719
        %v721 = vcombine.low %v665, %v697
        %v722 = vcombine.high %v665, %v697
        %v723 = vcombine.low %v672, %v704
        %v724 = vcombine.high %v672, %v704
        %v725 = vcombine.low %v681, %v713
        %v726 = vcombine.high %v681, %v713
        %v727 = vcombine.low %v688, %v720
        %v728 = vcombine.high %v688, %v720
        %v729 = vcombine.low %v147, %v158
        %v730 = vcombine.high %v147, %v158
        %v732 = vunpack.c.l.s4 1983009808
        %v733 = vunpack.c.0.s8 %v732
        %v734 = vlaneseq
        %v735 = vshrl.u32 %v734, 7
        %v736 = vsub.s32 %v733, %v735
        %v737 = vrot.slane %v729, %v736
        %v739 = vunpack.c.l.s4 1983009808
        %v740 = vunpack.c.0.s8 %v739
        %v741 = vlaneseq
        %v742 = vshrl.u32 %v741, 7
        %v743 = vsub.s32 %v740, %v742
        %v744 = vrot.slane %v730, %v743
        %v745 = vcombine.low %v169, %v180
        %v746 = vcombine.high %v169, %v180
        %v748 = vunpack.c.l.s4 1983009808
        %v749 = vunpack.c.0.s8 %v748
        %v750 = vlaneseq
        %v751 = vshrl.u32 %v750, 7
        %v752 = vsub.s32 %v749, %v751
        %v753 = vrot.slane %v745, %v752
        %v755 = vunpack.c.l.s4 1983009808
        %v756 = vunpack.c.0.s8 %v755
        %v757 = vlaneseq
        %v758 = vshrl.u32 %v757, 7
        %v759 = vsub.s32 %v756, %v758
        %v760 = vrot.slane %v746, %v759
        %v761 = vcombine.low %v737, %v737
        %v762 = vcombine.high %v737, %v737
        %v764 = vunpack.c.l.s4 1934713408
        %v765 = vunpack.c.0.s8 %v764
        %v766 = vlaneseq
        %v767 = vshrl.u32 %v766, 7
        %v768 = vsub.s32 %v765, %v767
        %v769 = vrot.slane %v761, %v768
        %v771 = vunpack.c.l.s4 1934713408
        %v772 = vunpack.c.0.s8 %v771
        %v773 = vlaneseq
        %v774 = vshrl.u32 %v773, 7
        %v775 = vsub.s32 %v772, %v774
        %v776 = vrot.slane %v762, %v775
        %v777 = vcombine.low %v744, %v744
        %v778 = vcombine.high %v744, %v744
        %v780 = vunpack.c.l.s4 1934713408
        %v781 = vunpack.c.0.s8 %v780
        %v782 = vlaneseq
        %v783 = vshrl.u32 %v782, 7
        %v784 = vsub.s32 %v781, %v783
        %v785 = vrot.slane %v777, %v784
        %v787 = vunpack.c.l.s4 1934713408
        %v788 = vunpack.c.0.s8 %v787
        %v789 = vlaneseq
        %v790 = vshrl.u32 %v789, 7
        %v791 = vsub.s32 %v788, %v790
        %v792 = vrot.slane %v778, %v791
        %v793 = vcombine.low %v753, %v753
        %v794 = vcombine.high %v753, %v753
        %v796 = vunpack.c.l.s4 1934713408
        %v797 = vunpack.c.0.s8 %v796
        %v798 = vlaneseq
        %v799 = vshrl.u32 %v798, 7
        %v800 = vsub.s32 %v797, %v799
        %v801 = vrot.slane %v793, %v800
        %v803 = vunpack.c.l.s4 1934713408
        %v804 = vunpack.c.0.s8 %v803
        %v805 = vlaneseq
        %v806 = vshrl.u32 %v805, 7
        %v807 = vsub.s32 %v804, %v806
        %v808 = vrot.slane %v794, %v807
        %v809 = vcombine.low %v760, %v760
        %v810 = vcombine.high %v760, %v760
        %v812 = vunpack.c.l.s4 1934713408
        %v813 = vunpack.c.0.s8 %v812
        %v814 = vlaneseq
        %v815 = vshrl.u32 %v814, 7
        %v816 = vsub.s32 %v813, %v815
        %v817 = vrot.slane %v809, %v816
        %v819 = vunpack.c.l.s4 1934713408
        %v820 = vunpack.c.0.s8 %v819
        %v821 = vlaneseq
        %v822 = vshrl.u32 %v821, 7
        %v823 = vsub.s32 %v820, %v822
        %v824 = vrot.slane %v810, %v823
        %v825 = vcombine.low %v769, %v801
        %v826 = vcombine.high %v769, %v801
        %v827 = vcombine.low %v776, %v808
        %v828 = vcombine.high %v776, %v808
        %v829 = vcombine.low %v785, %v817
        %v830 = vcombine.high %v785, %v817
        %v831 = vcombine.low %v792, %v824
        %v832 = vcombine.high %v792, %v824
        %v833 = vcombine.low %v191, %v202
        %v834 = vcombine.high %v191, %v202
        %v836 = vunpack.c.l.s4 1983009808
        %v837 = vunpack.c.0.s8 %v836
        %v838 = vlaneseq
        %v839 = vshrl.u32 %v838, 7
        %v840 = vsub.s32 %v837, %v839
        %v841 = vrot.slane %v833, %v840
        %v843 = vunpack.c.l.s4 1983009808
        %v844 = vunpack.c.0.s8 %v843
        %v845 = vlaneseq
        %v846 = vshrl.u32 %v845, 7
        %v847 = vsub.s32 %v844, %v846
        %v848 = vrot.slane %v834, %v847
        %v849 = vcombine.low %v213, %v224
        %v850 = vcombine.high %v213, %v224
        %v852 = vunpack.c.l.s4 1983009808
        %v853 = vunpack.c.0.s8 %v852
        %v854 = vlaneseq
        %v855 = vshrl.u32 %v854, 7
        %v856 = vsub.s32 %v853, %v855
        %v857 = vrot.slane %v849, %v856
        %v859 = vunpack.c.l.s4 1983009808
        %v860 = vunpack.c.0.s8 %v859
        %v861 = vlaneseq
        %v862 = vshrl.u32 %v861, 7
        %v863 = vsub.s32 %v860, %v862
        %v864 = vrot.slane %v850, %v863
        %v865 = vcombine.low %v841, %v841
        %v866 = vcombine.high %v841, %v841
        %v868 = vunpack.c.l.s4 1934713408
        %v869 = vunpack.c.0.s8 %v868
        %v870 = vlaneseq
        %v871 = vshrl.u32 %v870, 7
        %v872 = vsub.s32 %v869, %v871
        %v873 = vrot.slane %v865, %v872
        %v875 = vunpack.c.l.s4 1934713408
        %v876 = vunpack.c.0.s8 %v875
        %v877 = vlaneseq
        %v878 = vshrl.u32 %v877, 7
        %v879 = vsub.s32 %v876, %v878
        %v880 = vrot.slane %v866, %v879
        %v881 = vcombine.low %v848, %v848
        %v882 = vcombine.high %v848, %v848
        %v884 = vunpack.c.l.s4 1934713408
        %v885 = vunpack.c.0.s8 %v884
        %v886 = vlaneseq
        %v887 = vshrl.u32 %v886, 7
        %v888 = vsub.s32 %v885, %v887
        %v889 = vrot.slane %v881, %v888
        %v891 = vunpack.c.l.s4 1934713408
        %v892 = vunpack.c.0.s8 %v891
        %v893 = vlaneseq
        %v894 = vshrl.u32 %v893, 7
        %v895 = vsub.s32 %v892, %v894
        %v896 = vrot.slane %v882, %v895
        %v897 = vcombine.low %v857, %v857
        %v898 = vcombine.high %v857, %v857
        %v900 = vunpack.c.l.s4 1934713408
        %v901 = vunpack.c.0.s8 %v900
        %v902 = vlaneseq
        %v903 = vshrl.u32 %v902, 7
        %v904 = vsub.s32 %v901, %v903
        %v905 = vrot.slane %v897, %v904
        %v907 = vunpack.c.l.s4 1934713408
        %v908 = vunpack.c.0.s8 %v907
        %v909 = vlaneseq
        %v910 = vshrl.u32 %v909, 7
        %v911 = vsub.s32 %v908, %v910
        %v912 = vrot.slane %v898, %v911
        %v913 = vcombine.low %v864, %v864
        %v914 = vcombine.high %v864, %v864
        %v916 = vunpack.c.l.s4 1934713408
        %v917 = vunpack.c.0.s8 %v916
        %v918 = vlaneseq
        %v919 = vshrl.u32 %v918, 7
        %v920 = vsub.s32 %v917, %v919
        %v921 = vrot.slane %v913, %v920
        %v923 = vunpack.c.l.s4 1934713408
        %v924 = vunpack.c.0.s8 %v923
        %v925 = vlaneseq
        %v926 = vshrl.u32 %v925, 7
        %v927 = vsub.s32 %v924, %v926
        %v928 = vrot.slane %v914, %v927
        %v929 = vcombine.low %v873, %v905
        %v930 = vcombine.high %v873, %v905
        %v931 = vcombine.low %v880, %v912
        %v932 = vcombine.high %v880, %v912
        %v933 = vcombine.low %v889, %v921
        %v934 = vcombine.high %v889, %v921
        %v935 = vcombine.low %v896, %v928
        %v936 = vcombine.high %v896, %v928
        %v937 = vcombine.low %v235, %v246
        %v938 = vcombine.high %v235, %v246
        %v940 = vunpack.c.l.s4 1983009808
        %v941 = vunpack.c.0.s8 %v940
        %v942 = vlaneseq
        %v943 = vshrl.u32 %v942, 7
        %v944 = vsub.s32 %v941, %v943
        %v945 = vrot.slane %v937, %v944
        %v947 = vunpack.c.l.s4 1983009808
        %v948 = vunpack.c.0.s8 %v947
        %v949 = vlaneseq
        %v950 = vshrl.u32 %v949, 7
        %v951 = vsub.s32 %v948, %v950
        %v952 = vrot.slane %v938, %v951
        %v953 = vcombine.low %v257, %v268
        %v954 = vcombine.high %v257, %v268
        %v956 = vunpack.c.l.s4 1983009808
        %v957 = vunpack.c.0.s8 %v956
        %v958 = vlaneseq
        %v959 = vshrl.u32 %v958, 7
        %v960 = vsub.s32 %v957, %v959
        %v961 = vrot.slane %v953, %v960
        %v963 = vunpack.c.l.s4 1983009808
        %v964 = vunpack.c.0.s8 %v963
        %v965 = vlaneseq
        %v966 = vshrl.u32 %v965, 7
        %v967 = vsub.s32 %v964, %v966
        %v968 = vrot.slane %v954, %v967
        %v969 = vcombine.low %v945, %v945
        %v970 = vcombine.high %v945, %v945
        %v972 = vunpack.c.l.s4 1934713408
        %v973 = vunpack.c.0.s8 %v972
        %v974 = vlaneseq
        %v975 = vshrl.u32 %v974, 7
        %v976 = vsub.s32 %v973, %v975
        %v977 = vrot.slane %v969, %v976
        %v979 = vunpack.c.l.s4 1934713408
        %v980 = vunpack.c.0.s8 %v979
        %v981 = vlaneseq
        %v982 = vshrl.u32 %v981, 7
        %v983 = vsub.s32 %v980, %v982
        %v984 = vrot.slane %v970, %v983
        %v985 = vcombine.low %v952, %v952
        %v986 = vcombine.high %v952, %v952
        %v988 = vunpack.c.l.s4 1934713408
        %v989 = vunpack.c.0.s8 %v988
        %v990 = vlaneseq
        %v991 = vshrl.u32 %v990, 7
        %v992 = vsub.s32 %v989, %v991
        %v993 = vrot.slane %v985, %v992
        %v995 = vunpack.c.l.s4 1934713408
        %v996 = vunpack.c.0.s8 %v995
        %v997 = vlaneseq
        %v998 = vshrl.u32 %v997, 7
        %v999 = vsub.s32 %v996, %v998
        %v1000 = vrot.slane %v986, %v999
        %v1001 = vcombine.low %v961, %v961
        %v1002 = vcombine.high %v961, %v961
        %v1004 = vunpack.c.l.s4 1934713408
        %v1005 = vunpack.c.0.s8 %v1004
        %v1006 = vlaneseq
        %v1007 = vshrl.u32 %v1006, 7
        %v1008 = vsub.s32 %v1005, %v1007
        %v1009 = vrot.slane %v1001, %v1008
        %v1011 = vunpack.c.l.s4 1934713408
        %v1012 = vunpack.c.0.s8 %v1011
        %v1013 = vlaneseq
        %v1014 = vshrl.u32 %v1013, 7
        %v1015 = vsub.s32 %v1012, %v1014
        %v1016 = vrot.slane %v1002, %v1015
        %v1017 = vcombine.low %v968, %v968
        %v1018 = vcombine.high %v968, %v968
        %v1020 = vunpack.c.l.s4 1934713408
        %v1021 = vunpack.c.0.s8 %v1020
        %v1022 = vlaneseq
        %v1023 = vshrl.u32 %v1022, 7
        %v1024 = vsub.s32 %v1021, %v1023
        %v1025 = vrot.slane %v1017, %v1024
        %v1027 = vunpack.c.l.s4 1934713408
        %v1028 = vunpack.c.0.s8 %v1027
        %v1029 = vlaneseq
        %v1030 = vshrl.u32 %v1029, 7
        %v1031 = vsub.s32 %v1028, %v1030
        %v1032 = vrot.slane %v1018, %v1031
        %v1033 = vcombine.low %v977, %v1009
        %v1034 = vcombine.high %v977, %v1009
        %v1035 = vcombine.low %v984, %v1016
        %v1036 = vcombine.high %v984, %v1016
        %v1037 = vcombine.low %v993, %v1025
        %v1038 = vcombine.high %v993, %v1025
        %v1039 = vcombine.low %v1000, %v1032
        %v1040 = vcombine.high %v1000, %v1032
        %v1041 = vcombine.low %v279, %v290
        %v1042 = vcombine.high %v279, %v290
        %v1044 = vunpack.c.l.s4 1983009808
        %v1045 = vunpack.c.0.s8 %v1044
        %v1046 = vlaneseq
        %v1047 = vshrl.u32 %v1046, 7
        %v1048 = vsub.s32 %v1045, %v1047
        %v1049 = vrot.slane %v1041, %v1048
        %v1051 = vunpack.c.l.s4 1983009808
        %v1052 = vunpack.c.0.s8 %v1051
        %v1053 = vlaneseq
        %v1054 = vshrl.u32 %v1053, 7
        %v1055 = vsub.s32 %v1052, %v1054
        %v1056 = vrot.slane %v1042, %v1055
        %v1057 = vcombine.low %v301, %v312
        %v1058 = vcombine.high %v301, %v312
        %v1060 = vunpack.c.l.s4 1983009808
        %v1061 = vunpack.c.0.s8 %v1060
        %v1062 = vlaneseq
        %v1063 = vshrl.u32 %v1062, 7
        %v1064 = vsub.s32 %v1061, %v1063
        %v1065 = vrot.slane %v1057, %v1064
        %v1067 = vunpack.c.l.s4 1983009808
        %v1068 = vunpack.c.0.s8 %v1067
        %v1069 = vlaneseq
        %v1070 = vshrl.u32 %v1069, 7
        %v1071 = vsub.s32 %v1068, %v1070
        %v1072 = vrot.slane %v1058, %v1071
        %v1073 = vcombine.low %v1049, %v1049
        %v1074 = vcombine.high %v1049, %v1049
        %v1076 = vunpack.c.l.s4 1934713408
        %v1077 = vunpack.c.0.s8 %v1076
        %v1078 = vlaneseq
        %v1079 = vshrl.u32 %v1078, 7
        %v1080 = vsub.s32 %v1077, %v1079
        %v1081 = vrot.slane %v1073, %v1080
        %v1083 = vunpack.c.l.s4 1934713408
        %v1084 = vunpack.c.0.s8 %v1083
        %v1085 = vlaneseq
        %v1086 = vshrl.u32 %v1085, 7
        %v1087 = vsub.s32 %v1084, %v1086
        %v1088 = vrot.slane %v1074, %v1087
        %v1089 = vcombine.low %v1056, %v1056
        %v1090 = vcombine.high %v1056, %v1056
        %v1092 = vunpack.c.l.s4 1934713408
        %v1093 = vunpack.c.0.s8 %v1092
        %v1094 = vlaneseq
        %v1095 = vshrl.u32 %v1094, 7
        %v1096 = vsub.s32 %v1093, %v1095
        %v1097 = vrot.slane %v1089, %v1096
        %v1099 = vunpack.c.l.s4 1934713408
        %v1100 = vunpack.c.0.s8 %v1099
        %v1101 = vlaneseq
        %v1102 = vshrl.u32 %v1101, 7
        %v1103 = vsub.s32 %v1100, %v1102
        %v1104 = vrot.slane %v1090, %v1103
        %v1105 = vcombine.low %v1065, %v1065
        %v1106 = vcombine.high %v1065, %v1065
        %v1108 = vunpack.c.l.s4 1934713408
        %v1109 = vunpack.c.0.s8 %v1108
        %v1110 = vlaneseq
        %v1111 = vshrl.u32 %v1110, 7
        %v1112 = vsub.s32 %v1109, %v1111
        %v1113 = vrot.slane %v1105, %v1112
        %v1115 = vunpack.c.l.s4 1934713408
        %v1116 = vunpack.c.0.s8 %v1115
        %v1117 = vlaneseq
        %v1118 = vshrl.u32 %v1117, 7
        %v1119 = vsub.s32 %v1116, %v1118
        %v1120 = vrot.slane %v1106, %v1119
        %v1121 = vcombine.low %v1072, %v1072
        %v1122 = vcombine.high %v1072, %v1072
        %v1124 = vunpack.c.l.s4 1934713408
        %v1125 = vunpack.c.0.s8 %v1124
        %v1126 = vlaneseq
        %v1127 = vshrl.u32 %v1126, 7
        %v1128 = vsub.s32 %v1125, %v1127
        %v1129 = vrot.slane %v1121, %v1128
        %v1131 = vunpack.c.l.s4 1934713408
        %v1132 = vunpack.c.0.s8 %v1131
        %v1133 = vlaneseq
        %v1134 = vshrl.u32 %v1133, 7
        %v1135 = vsub.s32 %v1132, %v1134
        %v1136 = vrot.slane %v1122, %v1135
        %v1137 = vcombine.low %v1081, %v1113
        %v1138 = vcombine.high %v1081, %v1113
        %v1139 = vcombine.low %v1088, %v1120
        %v1140 = vcombine.high %v1088, %v1120
        %v1141 = vcombine.low %v1097, %v1129
        %v1142 = vcombine.high %v1097, %v1129
        %v1143 = vcombine.low %v1104, %v1136
        %v1144 = vcombine.high %v1104, %v1136
        %1149 = vrot.lane.b32.xlu0 %v410, 2
        %v1150 = vpop.permute.xlu0 %1149
        %1151 = vrot.lane.b32.xlu0 %v514, 2
        %v1152 = vpop.permute.xlu0 %1151
        %1153 = vrot.lane.b32.xlu0 %v618, 2
        %v1154 = vpop.permute.xlu0 %1153
        %1155 = vrot.lane.b32.xlu0 %v722, 2
        %v1156 = vpop.permute.xlu0 %1155
        %1165 = vrot.lane.b32.xlu0 %v411, 4
        %v1166 = vpop.permute.xlu0 %1165
        %1167 = vrot.lane.b32.xlu0 %v515, 4
        %v1168 = vpop.permute.xlu0 %1167
        %1169 = vrot.lane.b32.xlu0 %v619, 4
        %v1170 = vpop.permute.xlu0 %1169
        %1171 = vrot.lane.b32.xlu0 %v723, 4
        %v1172 = vpop.permute.xlu0 %1171
        %1181 = vrot.lane.b32.xlu0 %v412, 6
        %v1182 = vpop.permute.xlu0 %1181
        %1183 = vrot.lane.b32.xlu0 %v516, 6
        %v1184 = vpop.permute.xlu0 %1183
        %1185 = vrot.lane.b32.xlu0 %v620, 6
        %v1186 = vpop.permute.xlu0 %1185
        %1187 = vrot.lane.b32.xlu0 %v724, 6
        %v1188 = vpop.permute.xlu0 %1187
        %1197 = vrot.lane.b32.xlu0 %v413, 8
        %v1198 = vpop.permute.xlu0 %1197
        %1199 = vrot.lane.b32.xlu0 %v517, 8
        %v1200 = vpop.permute.xlu0 %1199
        %1201 = vrot.lane.b32.xlu0 %v621, 8
        %v1202 = vpop.permute.xlu0 %1201
        %1203 = vrot.lane.b32.xlu0 %v725, 8
        %v1204 = vpop.permute.xlu0 %1203
        %1213 = vrot.lane.b32.xlu0 %v414, 10
        %v1214 = vpop.permute.xlu0 %1213
        %1215 = vrot.lane.b32.xlu0 %v518, 10
        %v1216 = vpop.permute.xlu0 %1215
        %1217 = vrot.lane.b32.xlu0 %v622, 10
        %v1218 = vpop.permute.xlu0 %1217
        %1219 = vrot.lane.b32.xlu0 %v726, 10
        %v1220 = vpop.permute.xlu0 %1219
        %1229 = vrot.lane.b32.xlu0 %v415, 12
        %v1230 = vpop.permute.xlu0 %1229
        %1231 = vrot.lane.b32.xlu0 %v519, 12
        %v1232 = vpop.permute.xlu0 %1231
        %1233 = vrot.lane.b32.xlu0 %v623, 12
        %v1234 = vpop.permute.xlu0 %1233
        %1235 = vrot.lane.b32.xlu0 %v727, 12
        %v1236 = vpop.permute.xlu0 %1235
        %1245 = vrot.lane.b32.xlu0 %v416, 14
        %v1246 = vpop.permute.xlu0 %1245
        %1247 = vrot.lane.b32.xlu0 %v520, 14
        %v1248 = vpop.permute.xlu0 %1247
        %1249 = vrot.lane.b32.xlu0 %v624, 14
        %v1250 = vpop.permute.xlu0 %1249
        %1251 = vrot.lane.b32.xlu0 %v728, 14
        %v1252 = vpop.permute.xlu0 %1251
        %1261 = vrot.lane.b32.xlu0 %v825, 16
        %v1262 = vpop.permute.xlu0 %1261
        %1263 = vrot.lane.b32.xlu0 %v929, 16
        %v1264 = vpop.permute.xlu0 %1263
        %1265 = vrot.lane.b32.xlu0 %v1033, 16
        %v1266 = vpop.permute.xlu0 %1265
        %1267 = vrot.lane.b32.xlu0 %v1137, 16
        %v1268 = vpop.permute.xlu0 %1267
        %1277 = vrot.lane.b32.xlu0 %v826, 18
        %v1278 = vpop.permute.xlu0 %1277
        %1279 = vrot.lane.b32.xlu0 %v930, 18
        %v1280 = vpop.permute.xlu0 %1279
        %1281 = vrot.lane.b32.xlu0 %v1034, 18
        %v1282 = vpop.permute.xlu0 %1281
        %1283 = vrot.lane.b32.xlu0 %v1138, 18
        %v1284 = vpop.permute.xlu0 %1283
        %1293 = vrot.lane.b32.xlu0 %v827, 20
        %v1294 = vpop.permute.xlu0 %1293
        %1295 = vrot.lane.b32.xlu0 %v931, 20
        %v1296 = vpop.permute.xlu0 %1295
        %1297 = vrot.lane.b32.xlu0 %v1035, 20
        %v1298 = vpop.permute.xlu0 %1297
        %1299 = vrot.lane.b32.xlu0 %v1139, 20
        %v1300 = vpop.permute.xlu0 %1299
        %1309 = vrot.lane.b32.xlu0 %v828, 22
        %v1310 = vpop.permute.xlu0 %1309
        %1311 = vrot.lane.b32.xlu0 %v932, 22
        %v1312 = vpop.permute.xlu0 %1311
        %1313 = vrot.lane.b32.xlu0 %v1036, 22
        %v1314 = vpop.permute.xlu0 %1313
        %1315 = vrot.lane.b32.xlu0 %v1140, 22
        %v1316 = vpop.permute.xlu0 %1315
        %1325 = vrot.lane.b32.xlu0 %v829, 24
        %v1326 = vpop.permute.xlu0 %1325
        %1327 = vrot.lane.b32.xlu0 %v933, 24
        %v1328 = vpop.permute.xlu0 %1327
        %1329 = vrot.lane.b32.xlu0 %v1037, 24
        %v1330 = vpop.permute.xlu0 %1329
        %1331 = vrot.lane.b32.xlu0 %v1141, 24
        %v1332 = vpop.permute.xlu0 %1331
        %1341 = vrot.lane.b32.xlu0 %v830, 26
        %v1342 = vpop.permute.xlu0 %1341
        %1343 = vrot.lane.b32.xlu0 %v934, 26
        %v1344 = vpop.permute.xlu0 %1343
        %1345 = vrot.lane.b32.xlu0 %v1038, 26
        %v1346 = vpop.permute.xlu0 %1345
        %1347 = vrot.lane.b32.xlu0 %v1142, 26
        %v1348 = vpop.permute.xlu0 %1347
        %1357 = vrot.lane.b32.xlu0 %v831, 28
        %v1358 = vpop.permute.xlu0 %1357
        %1359 = vrot.lane.b32.xlu0 %v935, 28
        %v1360 = vpop.permute.xlu0 %1359
        %1361 = vrot.lane.b32.xlu0 %v1039, 28
        %v1362 = vpop.permute.xlu0 %1361
        %1363 = vrot.lane.b32.xlu0 %v1143, 28
        %v1364 = vpop.permute.xlu0 %1363
        %1373 = vrot.lane.b32.xlu0 %v832, 30
        %v1374 = vpop.permute.xlu0 %1373
        %1375 = vrot.lane.b32.xlu0 %v936, 30
        %v1376 = vpop.permute.xlu0 %1375
        %1377 = vrot.lane.b32.xlu0 %v1040, 30
        %v1378 = vpop.permute.xlu0 %1377
        %1379 = vrot.lane.b32.xlu0 %v1144, 30
        %v1380 = vpop.permute.xlu0 %1379
        %vm1385 = vcmask 15360
        %v1386 = vsel %vm1385, %v409, %v1150
        %v1387 = vsel %vm1385, %v513, %v1152
        %v1388 = vsel %vm1385, %v617, %v1154
        %v1389 = vsel %vm1385, %v721, %v1156
        %vm1390 = vcmask 31744
        %v1391 = vsel %vm1390, %v1386, %v1166
        %v1392 = vsel %vm1390, %v1387, %v1168
        %v1393 = vsel %vm1390, %v1388, %v1170
        %v1394 = vsel %vm1390, %v1389, %v1172
        %vm1395 = vcmask 48128
        %v1396 = vsel %vm1395, %v1391, %v1182
        %v1397 = vsel %vm1395, %v1392, %v1184
        %v1398 = vsel %vm1395, %v1393, %v1186
        %v1399 = vsel %vm1395, %v1394, %v1188
        %vm1400 = vcmask 64512
        %v1401 = vsel %vm1400, %v1396, %v1198
        %v1402 = vsel %vm1400, %v1397, %v1200
        %v1403 = vsel %vm1400, %v1398, %v1202
        %v1404 = vsel %vm1400, %v1399, %v1204
        %vm1405 = vcmask 80896
        %v1406 = vsel %vm1405, %v1401, %v1214
        %v1407 = vsel %vm1405, %v1402, %v1216
        %v1408 = vsel %vm1405, %v1403, %v1218
        %v1409 = vsel %vm1405, %v1404, %v1220
        %vm1410 = vcmask 97280
        %v1411 = vsel %vm1410, %v1406, %v1230
        %v1412 = vsel %vm1410, %v1407, %v1232
        %v1413 = vsel %vm1410, %v1408, %v1234
        %v1414 = vsel %vm1410, %v1409, %v1236
        %vm1415 = vcmask 113664
        %v1416 = vsel %vm1415, %v1411, %v1246
        %v1417 = vsel %vm1415, %v1412, %v1248
        %v1418 = vsel %vm1415, %v1413, %v1250
        %v1419 = vsel %vm1415, %v1414, %v1252
        %vm1420 = vcmask 130048
        %v1421 = vsel %vm1420, %v1416, %v1262
        %v1422 = vsel %vm1420, %v1417, %v1264
        %v1423 = vsel %vm1420, %v1418, %v1266
        %v1424 = vsel %vm1420, %v1419, %v1268
        %vm1425 = vcmask 146432
        %v1426 = vsel %vm1425, %v1421, %v1278
        %v1427 = vsel %vm1425, %v1422, %v1280
        %v1428 = vsel %vm1425, %v1423, %v1282
        %v1429 = vsel %vm1425, %v1424, %v1284
        %vm1430 = vcmask 162816
        %v1431 = vsel %vm1430, %v1426, %v1294
        %v1432 = vsel %vm1430, %v1427, %v1296
        %v1433 = vsel %vm1430, %v1428, %v1298
        %v1434 = vsel %vm1430, %v1429, %v1300
        %vm1435 = vcmask 179200
        %v1436 = vsel %vm1435, %v1431, %v1310
        %v1437 = vsel %vm1435, %v1432, %v1312
        %v1438 = vsel %vm1435, %v1433, %v1314
        %v1439 = vsel %vm1435, %v1434, %v1316
        %vm1440 = vcmask 195584
        %v1441 = vsel %vm1440, %v1436, %v1326
        %v1442 = vsel %vm1440, %v1437, %v1328
        %v1443 = vsel %vm1440, %v1438, %v1330
        %v1444 = vsel %vm1440, %v1439, %v1332
        %vm1445 = vcmask 211968
        %v1446 = vsel %vm1445, %v1441, %v1342
        %v1447 = vsel %vm1445, %v1442, %v1344
        %v1448 = vsel %vm1445, %v1443, %v1346
        %v1449 = vsel %vm1445, %v1444, %v1348
        %vm1450 = vcmask 228352
        %v1451 = vsel %vm1450, %v1446, %v1358
        %v1452 = vsel %vm1450, %v1447, %v1360
        %v1453 = vsel %vm1450, %v1448, %v1362
        %v1454 = vsel %vm1450, %v1449, %v1364
        %vm1455 = vcmask 244736
        %v1456 = vsel %vm1455, %v1451, %v1374
        %v1457 = vsel %vm1455, %v1452, %v1376
        %v1458 = vsel %vm1455, %v1453, %v1378
        %v1459 = vsel %vm1455, %v1454, %v1380
        %vm1460 = vcmask 261120
        %1461 = vst.msk [vmem:[%s134] sm:$0xff] %vm1460, %v1456
        %1462 = vst.msk [vmem:[%s134 + $0x8] sm:$0xff] %vm1460, %v1457
        %1463 = vst.msk [vmem:[%s134 + $0x10] sm:$0xff] %vm1460, %v1458
        %1464 = vst.msk [vmem:[%s134 + $0x18] sm:$0xff] %vm1460, %v1459
        %s1465 = sand.u32 %s52, 1
        %s1466 = scalar_lea.sflag [#allocation4], %s1465
        %s1467 = sand.u32 %s52, 1
        %s1468 = smul.addr %s1467, 32
        %s1469 = scalar_lea.vmem [#allocation5], %s1468
        // Predicated region
        $region29: #{tpu_custom_call.1} parent=23 // pred_check
          %p1470 = pneg %p62
        $region30: #{tpu_custom_call.1} parent=23 // pred_check_branch
          %1472 = sbr.rel (%p1470) target = $region32
        $region31: #{tpu_custom_call.1} parent=23 // pred_region
          %s1474 = ssub.s32 512, 512
          %1475 = vsyncadd %s1466, %s1474
          %s1476 = smul.addr %s18, 4
          %s1477 = smul.addr %s1476, 128
          %s1478 = scalar_lea.hbm %s1, %s1477
          %s1479 = sshll.u32 %s1469, 4
          %s1480 = int_to_ptr.vmem [resolvable:$true] %s1479
          %1485 = dma.vmem_to_hbm [thread:$0]  %s1480, 512, %s1478, %s1466, 128, 128, 8
        $region32: #{tpu_custom_call.1} parent=23 // pred_fallthru
          _
      $region24: #{tpu_custom_call.1} parent=5 // pred_fallthru
        _
      %p1486 = scmp.le.s32.totalorder 2, %s13
      // Predicated region
      $region33: #{tpu_custom_call.1} parent=5 // pred_check
        %p1487 = pneg %p1486
      $region34: #{tpu_custom_call.1} parent=5 // pred_check_branch
        %1489 = sbr.rel (%p1487) target = $region36
      $region35: #{tpu_custom_call.1} parent=5 // pred_region
        %s1490 = ssub.s32 %s13, 2
        // Predicated region
        $region37: #{tpu_custom_call.1} parent=35 // pred_check
          %p1491 = pneg %p68
        $region38: #{tpu_custom_call.1} parent=35 // pred_check_branch
          %1493 = sbr.rel (%p1491) target = $region40
        $region39: #{tpu_custom_call.1} parent=35 // pred_region
          %s1494 = sand.u32 %s53, 1
          %s1495 = scalar_lea.sflag [#allocation4], %s1494
          %s1496 = sand.u32 %s53, 1
          %s1497 = smul.addr %s1496, 32
          %s1498 = scalar_lea.vmem [#allocation5], %s1497
          %1499 = dma.done %s1495, 512
        $region40: #{tpu_custom_call.1} parent=35 // pred_fallthru
          _
      $region36: #{tpu_custom_call.1} parent=5 // pred_fallthru
        _
    $region6: #{tpu_custom_call.1} parent=1 // loop_footer
      %s17 = sadd.s32 1, %s13
    $region7: #{tpu_custom_call.1} parent=1 // loop_footer_branch
      %12 = sbr.rel target = $region3
    $region8: #{tpu_custom_call.1} parent=1 // loop_exit
      _
    %1500 = vsyncpa [#allocation3], 1
    %s1501 = scalar_lea.sflag [#allocation3], 1
    %1502 = vsyncpa %s1501, 1
    %1503 = vsyncpa [#allocation4], 1
    %s1504 = scalar_lea.sflag [#allocation4], 1
    %1505 = vsyncpa %s1504, 1

</llo_original>
